<compile_context>
chip_gen: v7x
topology: tpu7x:2x2x1
jax: 0.10.0
libtpu: 0.0.40
codegen_flags: <defaults>
</compile_context>

<pallas_src>
import jax
import jax.numpy as jnp
from jax.experimental import pallas as pl
from jax.experimental.pallas import tpu as pltpu


def _pixel_shuffle_kernel(x_ref, o_ref):
    # x_ref block: (1, r, r, TH, W)   indexed as (b, i, j, h, w)
    # o_ref block: (1, TH*r, W*r)     indexed as (b, h*r + i, w*r + j)
    _, r, _, th, w = x_ref.shape
    x = x_ref[0]                          # (r, r, TH, W) = (i, j, h, w)
    y = jnp.transpose(x, (2, 0, 3, 1))    # (TH, r, W, r) = (h, i, w, j)
    # Rows land at h*r + i, lanes at w*r + j -> one dense full-tile store.
    o_ref[0] = y.reshape(th * r, w * r)


def _pick_h_tile(h, w, r, itemsize, target_bytes=4 * 1024 * 1024):
    """Rows of H per grid step: big enough to amortize per-step overhead,
    a multiple of 8 (sublane tiling) and small enough that double-buffered
    in+out blocks stay well under the VMEM limit."""
    per_row = max(1, 2 * r * r * w * itemsize)   # in + out bytes per H row
    th = max(1, target_bytes // per_row)
    if th >= h or h <= 8:
        return h
    th = max(8, (min(th, h) // 8) * 8)
    while th > 8 and h % th != 0:                # prefer exact tiling of H
        th -= 8
    return th


def pixel_shuffle_pallas(x, upscale_factor, *, h_tile=None):
    """PixelShuffle matching the reference module.

    2-D: x (N, C, H, W), C % r**2 == 0  ->  (N, C//r**2, H*r, W*r)  [Pallas]
    1-D: x (N, C, L),    C % r    == 0  ->  (N, C//r,    L*r)       [free reshape]
    """
    r = int(upscale_factor)
    if r == 1:
        return x

    if x.ndim == 3:
        # 1-D branch of the reference module: its permute is the identity,
        # so the whole op is a contiguous reshape (no data movement needed).
        n, c, l = x.shape
        assert c % r == 0, "channels must be divisible by upscale_factor"
        return x.reshape(n, c // r, l * r)

    if x.ndim != 4:
        # TODO(synk): generic >=3-D branch of the reference module not ported.
        raise NotImplementedError("only 1-D and 2-D pixel shuffle implemented")

    n, c, h, w = x.shape
    assert c % (r * r) == 0, "channels must be divisible by upscale_factor**2"
    c_out = c // (r * r)
    b = n * c_out

    # Free reshapes only (no HBM round trip): merge (N, C_out) and split the
    # remaining channels into (r, r).
    xr = x.reshape(b, r, r, h, w)

    th = h_tile if h_tile is not None else _pick_h_tile(h, w, r, x.dtype.itemsize)
    assert th == h or th % 8 == 0, "h_tile must be a multiple of 8 or equal H"
    grid = (b, pl.cdiv(h, th))

    out = pl.pallas_call(
        _pixel_shuffle_kernel,
        out_shape=jax.ShapeDtypeStruct((b, h * r, w * r), x.dtype),
        grid=grid,
        in_specs=[
            pl.BlockSpec(
                (1, r, r, th, w),
                lambda bi, hi: (bi, 0, 0, hi, 0),
            )
        ],
        out_specs=pl.BlockSpec(
            (1, th * r, w * r),
            lambda bi, hi: (bi, hi, 0),
        ),
        compiler_params=pltpu.CompilerParams(
            dimension_semantics=("parallel", "parallel"),
            vmem_limit_bytes=32 * 1024 * 1024,
        ),
        cost_estimate=pl.CostEstimate(
            flops=0,
            transcendentals=0,
            bytes_accessed=2 * x.size * x.dtype.itemsize,
        ),
    )(xr)

    # Free split of the merged leading dim back to (N, C_out).
    return out.reshape(n, c_out, h * r, w * r)


def pixel_shuffle_ref(x, upscale_factor):
    """Pure-JAX reference mirroring the torch module's generic code path."""
    r = int(upscale_factor)
    shape = list(x.shape)
    dim = len(shape) - 2
    c_out = shape[1] // (r ** dim)
    out_sizes = [d * r for d in shape[2:]]
    xv = x.reshape(shape[0], c_out, *([r] * dim + shape[2:]))
    idx = list(range(2, 2 + 2 * dim))
    idx = idx[1::2] + idx[0::2]
    y = jnp.transpose(xv, (0, 1, *idx[::-1]))
    return y.reshape(shape[0], c_out, *out_sizes)


if __name__ == "__main__":
    key = jax.random.PRNGKey(0)
    k1, k2, k3, k4 = jax.random.split(key, 4)

    # Case 1: N=2, C=16, H=W=8, r=2 -> out (2, 4, 16, 16)
    x1 = jax.random.normal(k1, (2, 16, 8, 8), dtype=jnp.float32)
    o1 = jax.block_until_ready(pixel_shuffle_pallas(x1, 2))
    assert o1.shape == (2, 4, 16, 16), o1.shape
    assert jnp.array_equal(o1, pixel_shuffle_ref(x1, 2)), "mismatch (r=2)"

    # Case 2: N=1, C=18, H=16, W=8, r=3 -> out (1, 2, 48, 24)
    x2 = jax.random.normal(k2, (1, 18, 16, 8), dtype=jnp.float32)
    o2 = jax.block_until_ready(pixel_shuffle_pallas(x2, 3))
    assert o2.shape == (1, 2, 48, 24), o2.shape
    assert jnp.array_equal(o2, pixel_shuffle_ref(x2, 3)), "mismatch (r=3)"

    # Case 3: exercise the multi-tile H pipeline (TH=8 over H=32), lane-dense W.
    x3 = jax.random.normal(k3, (1, 4, 32, 128), dtype=jnp.float32)
    o3 = jax.block_until_ready(pixel_shuffle_pallas(x3, 2, h_tile=8))
    assert o3.shape == (1, 1, 64, 256), o3.shape
    assert jnp.array_equal(o3, pixel_shuffle_ref(x3, 2)), "mismatch (tiled H)"

    # Case 4: 1-D branch of the module (N=2, C=6, L=8, r=3) -> out (2, 2, 24)
    x4 = jax.random.normal(k4, (2, 6, 8), dtype=jnp.float32)
    o4 = jax.block_until_ready(pixel_shuffle_pallas(x4, 3))
    assert o4.shape == (2, 2, 24), o4.shape
    assert jnp.array_equal(o4, pixel_shuffle_ref(x4, 3)), "mismatch (1-D)"

    print("KERNEL_OK")
</pallas_src>

<mosaic_0001>
module attributes {stable_mosaic.version = 11 : i64} {
  func.func @_pixel_shuffle_kernel(%arg0: i32, %arg1: i32, %arg2: memref<1x2x2x8x8xf32, #tpu.memory_space<vmem>>, %arg3: memref<1x16x16xf32, #tpu.memory_space<vmem>>) attributes {dimension_semantics = [#tpu.dimension_semantics<parallel>, #tpu.dimension_semantics<parallel>], iteration_bounds = array<i64: 8, 1>, scalar_prefetch = 0 : i64, scratch_operands = 0 : i64, tpu.core_type = #tpu.core_type<tc>, window_params = [{transform_indices = @transform_0, window_bounds = array<i64: 1, 2, 2, 8, 8>}, {transform_indices = @transform_1, window_bounds = array<i64: 1, 16, 16>}]} {
    %c0 = arith.constant 0 : index
    %c0_0 = arith.constant 0 : index
    %c0_1 = arith.constant 0 : index
    %c0_2 = arith.constant 0 : index
    %c0_3 = arith.constant 0 : index
    %0 = vector.load %arg2[%c0, %c0_0, %c0_1, %c0_2, %c0_3] : memref<1x2x2x8x8xf32, #tpu.memory_space<vmem>>, vector<1x2x2x8x8xf32>
    %1 = vector.shape_cast %0 : vector<1x2x2x8x8xf32> to vector<2x2x8x8xf32>
    %2 = tpu.transpose %1, [2, 0, 3, 1] : vector<2x2x8x8xf32> -> vector<8x2x8x2xf32>
    %3 = vector.shape_cast %2 : vector<8x2x8x2xf32> to vector<16x16xf32>
    %c0_4 = arith.constant 0 : index
    %c0_5 = arith.constant 0 : index
    %c0_6 = arith.constant 0 : index
    %4 = vector.load %arg3[%c0_4, %c0_5, %c0_6] : memref<1x16x16xf32, #tpu.memory_space<vmem>>, vector<1x16x16xf32>
    %5 = vector.shape_cast %4 : vector<1x16x16xf32> to vector<16x16xf32>
    %6 = vector.shape_cast %3 : vector<16x16xf32> to vector<1x16x16xf32>
    tpu.vector_store %arg3[%c0_4, %c0_5, %c0_6], %6 {strides = array<i32>} : memref<1x16x16xf32, #tpu.memory_space<vmem>>, vector<1x16x16xf32>,
    return
  }
  func.func @transform_0(%arg0: i32, %arg1: i32) -> (i32, i32, i32, i32, i32) {
    %c0_i32 = arith.constant 0 : i32
    %c0_i32_0 = arith.constant 0 : i32
    %c0_i32_1 = arith.constant 0 : i32
    %c0_i32_2 = arith.constant 0 : i32
    return %arg0, %c0_i32, %c0_i32_0, %arg1, %c0_i32_1 : i32, i32, i32, i32, i32
  }
  func.func @transform_1(%arg0: i32, %arg1: i32) -> (i32, i32, i32) {
    %c0_i32 = arith.constant 0 : i32
    %c0_i32_0 = arith.constant 0 : i32
    return %arg0, %arg1, %c0_i32 : i32, i32, i32
  }
}

</mosaic_0001>

<llo_original>
// kernel: tpu_custom_call.1
$region0: #{tpu_custom_call.1}
  #allocation0 [shape = 'u32[]', space=smem, size = 0x4, offset = 0x4, fixed_abs, tag = 'smem constant byte address 0x4 - core index']
  #allocation1 [shape = 'u32[144,128]{1,0:T(1,128)}', space=vmem, size = 0x12000, scoped, tag = 'internal scratch']
  %s0 = inlined_call_operand.hbm [shape: f32[8,2,2,8,8], index: 0, kind: input, shape index: {}]
  %s1 = inlined_call_operand.hbm [shape: f32[8,16,16], index: 1, kind: output, shape index: {}]
  %s2 = sld [smem:[#allocation0]]
  $region41: #{tpu_custom_call.1} parent=0
    _
  %s4 = ssub.s32 1, %s2
  %s5 = scalar_select 0, %s4, %s2
  $region1: #{tpu_custom_call.1} parent=0
    #allocation2 [shape = 'u8[32768]{0}', space=vmem, size = 0x8000, scoped, tag = 'input window, operand 0']
    #allocation3 [shape = 's32[2]{0}', space=sflag, size = 0x8, scoped, tag = 'scoped memory for tpu_custom_call.1']
    #allocation4 [shape = 's32[2]{0}', space=sflag, size = 0x8, scoped, tag = 'scoped memory for tpu_custom_call.1']
    #allocation5 [shape = 'u8[16384]{0}', space=vmem, size = 0x4000, scoped, tag = 'output window, operand 0']
    %6 = vsyncpa [#allocation3], 0
    %s7 = scalar_lea.sflag [#allocation3], 1
    %8 = vsyncpa %s7, 0
    %9 = vsyncpa [#allocation4], 0
    %s10 = scalar_lea.sflag [#allocation4], 1
    %11 = vsyncpa %s10, 0
    loop: start=0, step=1, limit=10
    $region2: #{tpu_custom_call.1} parent=1 // loop_pre_header
      _
    $region3: #{tpu_custom_call.1} parent=1 // loop_header
      %s13 = sphi 0, %s17
      %p14 = scmp.ge.s32.totalorder %s13, 10
      %s20 = sphi 0, %s32
      %s21 = sphi 0, %s28
      %s22 = sphi 0, %s20
      %s23 = sphi 0, %s21
      %s24 = sphi 0, %s22
      %s25 = sphi 0, %s23
      %s37 = sphi 0, %s39
      %s40 = sphi 0, %s37
      %s41 = sphi 0, %s40
      %s57 = sphi 0, %s41
      %s65 = sphi 0, %s67
      %s68 = sphi 0, %s65
      %s69 = sphi 0, %s68
      %s85 = sphi 0, %s69
    $region4: #{tpu_custom_call.1} parent=1 // loop_header_branch
      %16 = sbr.rel (%p14) target = $region8
    $region5: #{tpu_custom_call.1} parent=1 // loop_body
      %s18 = ssub.s32 %s13, 1
      %s19 = ssub.s32 %s13, 2
      %s26 = sadd.s32 1, %s21
      %p27 = scmp.ge.s32.totalorder %s26, 1
      %s28 = scalar_select %p27, 0, %s26
      %s29 = sadd.s32 1, %s20
      %s30 = scalar_select %p27, %s29, %s20
      %p31 = scmp.ge.s32.totalorder %s30, 8
      %s32 = scalar_select %p31, 0, %s30
      %s33 = ssub.s32 %s20, %s32
      %s34 = ssub.s32 %s21, %s28
      %s35 = sor.u32 %s33, %s34
      %p36 = scmp.eq.s32.totalorder %s35, 0
      %s38 = sadd.s32 %s37, 1
      %s39 = scalar_select %p36, %s37, %s38
      %p42 = pneg %p36
      %p43 = scmp.eq.s32.totalorder %s13, 7
      %p44 = por %p42, %p43
      %p45 = scmp.ne.s32.totalorder %s37, %s40
      %p46 = scmp.eq.s32.totalorder %s13, 0
      %p47 = por %p45, %p46
      %p48 = scmp.ne.s32.totalorder %s37, %s40
      %p49 = scmp.eq.s32.totalorder %s18, 7
      %p50 = por %p48, %p49
      %p51 = scmp.ne.s32.totalorder %s40, %s41
      %p52 = scmp.eq.s32.totalorder %s18, 0
      %p53 = por %p51, %p52
      %p54 = scmp.ne.s32.totalorder %s40, %s41
      %p55 = scmp.eq.s32.totalorder %s19, 7
      %p56 = por %p54, %p55
      %p58 = scmp.ne.s32.totalorder %s41, %s57
      %p59 = scmp.eq.s32.totalorder %s19, 0
      %p60 = por %p58, %p59
      %s61 = ssub.s32 %s20, %s32
      %s62 = ssub.s32 %s21, %s28
      %s63 = sor.u32 %s61, %s62
      %p64 = scmp.eq.s32.totalorder %s63, 0
      %s66 = sadd.s32 %s65, 1
      %s67 = scalar_select %p64, %s65, %s66
      %p70 = pneg %p64
      %p71 = scmp.eq.s32.totalorder %s13, 7
      %p72 = por %p70, %p71
      %p73 = scmp.ne.s32.totalorder %s65, %s68
      %p74 = scmp.eq.s32.totalorder %s13, 0
      %p75 = por %p73, %p74
      %p76 = scmp.ne.s32.totalorder %s65, %s68
      %p77 = scmp.eq.s32.totalorder %s18, 7
      %p78 = por %p76, %p77
      %p79 = scmp.ne.s32.totalorder %s68, %s69
      %p80 = scmp.eq.s32.totalorder %s18, 0
      %p81 = por %p79, %p80
      %p82 = scmp.ne.s32.totalorder %s68, %s69
      %p83 = scmp.eq.s32.totalorder %s19, 7
      %p84 = por %p82, %p83
      %p86 = scmp.ne.s32.totalorder %s69, %s85
      %p87 = scmp.eq.s32.totalorder %s19, 0
      %p88 = por %p86, %p87
      %p89 = scmp.le.s32.totalorder 1, %s13
      %p90 = scmp.lt.s32.totalorder %s13, 9
      %p91 = pnand %p89, %p90
      %p92 = pneg %p91
      // Predicated region
      $region9: #{tpu_custom_call.1} parent=5 // pred_check
        _
      $region10: #{tpu_custom_call.1} parent=5 // pred_check_branch
        %94 = sbr.rel (%p91) target = $region12
      $region11: #{tpu_custom_call.1} parent=5 // pred_region
        %s95 = ssub.s32 %s13, 1
      $region12: #{tpu_custom_call.1} parent=5 // pred_fallthru
        _
      %p96 = scmp.lt.s32.totalorder %s13, 8
      // Predicated region
      $region13: #{tpu_custom_call.1} parent=5 // pred_check
        %p97 = pneg %p96
      $region14: #{tpu_custom_call.1} parent=5 // pred_check_branch
        %99 = sbr.rel (%p97) target = $region16
      $region15: #{tpu_custom_call.1} parent=5 // pred_region
        // Predicated region
        $region17: #{tpu_custom_call.1} parent=15 // pred_check
          %p100 = pneg %p47
        $region18: #{tpu_custom_call.1} parent=15 // pred_check_branch
          %102 = sbr.rel (%p100) target = $region20
        $region19: #{tpu_custom_call.1} parent=15 // pred_region
          %s103 = sand.u32 %s37, 1
          %s104 = scalar_lea.sflag [#allocation3], %s103
          %s105 = sand.u32 %s37, 1
          %s106 = smul.addr %s105, 32
          %s107 = scalar_lea.vmem [#allocation2], %s106
          %s109 = ssub.s32 512, 512
          %110 = vsyncadd %s104, %s109
          %s111 = smul.addr %s20, 4
          %s112 = sadd.s32 %s21, %s111
          %s113 = smul.addr %s112, 128
          %s114 = scalar_lea.hbm %s0, %s113
          %s115 = sshll.u32 %s107, 4
          %s116 = int_to_ptr.vmem [resolvable:$true] %s115
          %121 = dma.hbm_to_vmem [thread:$0]  %s114, 512, %s116, %s104, 128, 128, 8
        $region20: #{tpu_custom_call.1} parent=15 // pred_fallthru
          _
      $region16: #{tpu_custom_call.1} parent=5 // pred_fallthru
        _
      %p122 = scmp.le.s32.totalorder 1, %s13
      %p123 = scmp.lt.s32.totalorder %s13, 9
      %p124 = pnand %p122, %p123
      %p125 = pneg %p124
      // Predicated region
      $region21: #{tpu_custom_call.1} parent=5 // pred_check
        _
      $region22: #{tpu_custom_call.1} parent=5 // pred_check_branch
        %127 = sbr.rel (%p124) target = $region24
      $region23: #{tpu_custom_call.1} parent=5 // pred_region
        %s128 = ssub.s32 %s13, 1
        %s129 = sand.u32 %s40, 1
        %s130 = scalar_lea.sflag [#allocation3], %s129
        %s131 = sand.u32 %s40, 1
        %s132 = smul.addr %s131, 32
        %s133 = scalar_lea.vmem [#allocation2], %s132
        // Predicated region
        $region25: #{tpu_custom_call.1} parent=23 // pred_check
          %p134 = pneg %p53
        $region26: #{tpu_custom_call.1} parent=23 // pred_check_branch
          %136 = sbr.rel (%p134) target = $region28
        $region27: #{tpu_custom_call.1} parent=23 // pred_region
          %137 = dma.done %s130, 512
        $region28: #{tpu_custom_call.1} parent=23 // pred_fallthru
          _
        %s138 = sand.u32 %s40, 1
        %s139 = scalar_lea.sflag [#allocation3], %s138
        %s140 = sand.u32 %s40, 1
        %s141 = smul.addr %s140, 32
        %s142 = scalar_lea.vmem [#allocation2], %s141
        %p143 = pneg %p53
        %p144 = pneg %p50
        %p145 = pneg %p81
        %p146 = pneg %p78
        %s147 = sand.u32 %s68, 1
        %s148 = scalar_lea.sflag [#allocation4], %s147
        %s149 = sand.u32 %s68, 1
        %s150 = smul.addr %s149, 16
        %s151 = scalar_lea.vmem [#allocation5], %s150
        %s152 = smul.u32 2, %s23
        %v153 = vld [vmem:[%s133] sm:$0xff]
        %v154 = vld [vmem:[%s133 + $0x8] sm:$0xff]
        %v155 = vld [vmem:[%s133 + $0x10] sm:$0xff]
        %v156 = vld [vmem:[%s133 + $0x18] sm:$0xff]
        %157 = vxpose.xlu0.b32.start [1/16] %v153, 128
        %158 = vxpose.xlu0.b32.cont [2/16] 0.0, 128
        %159 = vxpose.xlu0.b32.cont [3/16] 0.0, 128
        %160 = vxpose.xlu0.b32.cont [4/16] 0.0, 128
        %161 = vxpose.xlu0.b32.cont [5/16] 0.0, 128
        %162 = vxpose.xlu0.b32.cont [6/16] 0.0, 128
        %163 = vxpose.xlu0.b32.cont [7/16] 0.0, 128
        %164 = vxpose.xlu0.b32.cont [8/16] 0.0, 128
        %165 = vxpose.xlu0.b32.cont [9/16] 0.0, 128
        %166 = vxpose.xlu0.b32.cont [10/16] 0.0, 128
        %167 = vxpose.xlu0.b32.cont [11/16] 0.0, 128
        %168 = vxpose.xlu0.b32.cont [12/16] 0.0, 128
        %169 = vxpose.xlu0.b32.cont [13/16] 0.0, 128
        %170 = vxpose.xlu0.b32.cont [14/16] 0.0, 128
        %171 = vxpose.xlu0.b32.cont [15/16] 0.0, 128
        %172 = vxpose.xlu0.b32.end [16/16] 0.0, 128
        %v173 = vpop.trf.xlu0
        %v174 = vpop.trf.xlu0
        %v175 = vpop.trf.xlu0
        %v176 = vpop.trf.xlu0
        %v177 = vpop.trf.xlu0
        %v178 = vpop.trf.xlu0
        %v179 = vpop.trf.xlu0
        %v180 = vpop.trf.xlu0
        %v181 = vpop.trf.xlu0
        %v182 = vpop.trf.xlu0
        %v183 = vpop.trf.xlu0
        %v184 = vpop.trf.xlu0
        %v185 = vpop.trf.xlu0
        %v186 = vpop.trf.xlu0
        %v187 = vpop.trf.xlu0
        %v188 = vpop.trf.xlu0
        %189 = vxpose.xlu0.b32.start [1/16] %v154, 128
        %190 = vxpose.xlu0.b32.cont [2/16] 0.0, 128
        %191 = vxpose.xlu0.b32.cont [3/16] 0.0, 128
        %192 = vxpose.xlu0.b32.cont [4/16] 0.0, 128
        %193 = vxpose.xlu0.b32.cont [5/16] 0.0, 128
        %194 = vxpose.xlu0.b32.cont [6/16] 0.0, 128
        %195 = vxpose.xlu0.b32.cont [7/16] 0.0, 128
        %196 = vxpose.xlu0.b32.cont [8/16] 0.0, 128
        %197 = vxpose.xlu0.b32.cont [9/16] 0.0, 128
        %198 = vxpose.xlu0.b32.cont [10/16] 0.0, 128
        %199 = vxpose.xlu0.b32.cont [11/16] 0.0, 128
        %200 = vxpose.xlu0.b32.cont [12/16] 0.0, 128
        %201 = vxpose.xlu0.b32.cont [13/16] 0.0, 128
        %202 = vxpose.xlu0.b32.cont [14/16] 0.0, 128
        %203 = vxpose.xlu0.b32.cont [15/16] 0.0, 128
        %204 = vxpose.xlu0.b32.end [16/16] 0.0, 128
        %v205 = vpop.trf.xlu0
        %v206 = vpop.trf.xlu0
        %v207 = vpop.trf.xlu0
        %v208 = vpop.trf.xlu0
        %v209 = vpop.trf.xlu0
        %v210 = vpop.trf.xlu0
        %v211 = vpop.trf.xlu0
        %v212 = vpop.trf.xlu0
        %v213 = vpop.trf.xlu0
        %v214 = vpop.trf.xlu0
        %v215 = vpop.trf.xlu0
        %v216 = vpop.trf.xlu0
        %v217 = vpop.trf.xlu0
        %v218 = vpop.trf.xlu0
        %v219 = vpop.trf.xlu0
        %v220 = vpop.trf.xlu0
        %221 = vxpose.xlu0.b32.start [1/16] %v155, 128
        %222 = vxpose.xlu0.b32.cont [2/16] 0.0, 128
        %223 = vxpose.xlu0.b32.cont [3/16] 0.0, 128
        %224 = vxpose.xlu0.b32.cont [4/16] 0.0, 128
        %225 = vxpose.xlu0.b32.cont [5/16] 0.0, 128
        %226 = vxpose.xlu0.b32.cont [6/16] 0.0, 128
        %227 = vxpose.xlu0.b32.cont [7/16] 0.0, 128
        %228 = vxpose.xlu0.b32.cont [8/16] 0.0, 128
        %229 = vxpose.xlu0.b32.cont [9/16] 0.0, 128
        %230 = vxpose.xlu0.b32.cont [10/16] 0.0, 128
        %231 = vxpose.xlu0.b32.cont [11/16] 0.0, 128
        %232 = vxpose.xlu0.b32.cont [12/16] 0.0, 128
        %233 = vxpose.xlu0.b32.cont [13/16] 0.0, 128
        %234 = vxpose.xlu0.b32.cont [14/16] 0.0, 128
        %235 = vxpose.xlu0.b32.cont [15/16] 0.0, 128
        %236 = vxpose.xlu0.b32.end [16/16] 0.0, 128
        %v237 = vpop.trf.xlu0
        %v238 = vpop.trf.xlu0
        %v239 = vpop.trf.xlu0
        %v240 = vpop.trf.xlu0
        %v241 = vpop.trf.xlu0
        %v242 = vpop.trf.xlu0
        %v243 = vpop.trf.xlu0
        %v244 = vpop.trf.xlu0
        %v245 = vpop.trf.xlu0
        %v246 = vpop.trf.xlu0
        %v247 = vpop.trf.xlu0
        %v248 = vpop.trf.xlu0
        %v249 = vpop.trf.xlu0
        %v250 = vpop.trf.xlu0
        %v251 = vpop.trf.xlu0
        %v252 = vpop.trf.xlu0
        %253 = vxpose.xlu0.b32.start [1/16] %v156, 128
        %254 = vxpose.xlu0.b32.cont [2/16] 0.0, 128
        %255 = vxpose.xlu0.b32.cont [3/16] 0.0, 128
        %256 = vxpose.xlu0.b32.cont [4/16] 0.0, 128
        %257 = vxpose.xlu0.b32.cont [5/16] 0.0, 128
        %258 = vxpose.xlu0.b32.cont [6/16] 0.0, 128
        %259 = vxpose.xlu0.b32.cont [7/16] 0.0, 128
        %260 = vxpose.xlu0.b32.cont [8/16] 0.0, 128
        %261 = vxpose.xlu0.b32.cont [9/16] 0.0, 128
        %262 = vxpose.xlu0.b32.cont [10/16] 0.0, 128
        %263 = vxpose.xlu0.b32.cont [11/16] 0.0, 128
        %264 = vxpose.xlu0.b32.cont [12/16] 0.0, 128
        %265 = vxpose.xlu0.b32.cont [13/16] 0.0, 128
        %266 = vxpose.xlu0.b32.cont [14/16] 0.0, 128
        %267 = vxpose.xlu0.b32.cont [15/16] 0.0, 128
        %268 = vxpose.xlu0.b32.end [16/16] 0.0, 128
        %v269 = vpop.trf.xlu0
        %v270 = vpop.trf.xlu0
        %v271 = vpop.trf.xlu0
        %v272 = vpop.trf.xlu0
        %v273 = vpop.trf.xlu0
        %v274 = vpop.trf.xlu0
        %v275 = vpop.trf.xlu0
        %v276 = vpop.trf.xlu0
        %v277 = vpop.trf.xlu0
        %v278 = vpop.trf.xlu0
        %v279 = vpop.trf.xlu0
        %v280 = vpop.trf.xlu0
        %v281 = vpop.trf.xlu0
        %v282 = vpop.trf.xlu0
        %v283 = vpop.trf.xlu0
        %v284 = vpop.trf.xlu0
        %v285 = vcombine.high %v173, 0.0
        %v287 = vunpack.c.l.s4 1983009808
        %v288 = vunpack.c.0.s8 %v287
        %v289 = vlaneseq
        %v290 = vshrl.u32 %v289, 7
        %v291 = vsub.s32 %v288, %v290
        %v292 = vrot.slane %v173, %v291
        %v294 = vunpack.c.l.s4 1983009808
        %v295 = vunpack.c.0.s8 %v294
        %v296 = vlaneseq
        %v297 = vshrl.u32 %v296, 7
        %v298 = vsub.s32 %v295, %v297
        %v299 = vrot.slane %v285, %v298
        %v300 = vcombine.high %v205, 0.0
        %v302 = vunpack.c.l.s4 1983009808
        %v303 = vunpack.c.0.s8 %v302
        %v304 = vlaneseq
        %v305 = vshrl.u32 %v304, 7
        %v306 = vsub.s32 %v303, %v305
        %v307 = vrot.slane %v205, %v306
        %v309 = vunpack.c.l.s4 1983009808
        %v310 = vunpack.c.0.s8 %v309
        %v311 = vlaneseq
        %v312 = vshrl.u32 %v311, 7
        %v313 = vsub.s32 %v310, %v312
        %v314 = vrot.slane %v300, %v313
        %v315 = vcombine.low %v292, %v307
        %v316 = vcombine.high %v292, %v307
        %v318 = vunpack.c.l.s4 1934713408
        %v319 = vunpack.c.0.s8 %v318
        %v320 = vlaneseq
        %v321 = vshrl.u32 %v320, 7
        %v322 = vsub.s32 %v319, %v321
        %v323 = vrot.slane %v315, %v322
        %v325 = vunpack.c.l.s4 1934713408
        %v326 = vunpack.c.0.s8 %v325
        %v327 = vlaneseq
        %v328 = vshrl.u32 %v327, 7
        %v329 = vsub.s32 %v326, %v328
        %v330 = vrot.slane %v316, %v329
        %v331 = vcombine.low %v299, %v314
        %v332 = vcombine.high %v299, %v314
        %v334 = vunpack.c.l.s4 1934713408
        %v335 = vunpack.c.0.s8 %v334
        %v336 = vlaneseq
        %v337 = vshrl.u32 %v336, 7
        %v338 = vsub.s32 %v335, %v337
        %v339 = vrot.slane %v331, %v338
        %v341 = vunpack.c.l.s4 1934713408
        %v342 = vunpack.c.0.s8 %v341
        %v343 = vlaneseq
        %v344 = vshrl.u32 %v343, 7
        %v345 = vsub.s32 %v342, %v344
        %v346 = vrot.slane %v332, %v345
        %v347 = vcombine.high %v323, 0.0
        %v348 = vcombine.high %v330, 0.0
        %v349 = vcombine.high %v339, 0.0
        %v350 = vcombine.high %v346, 0.0
        %v351 = vcombine.high %v237, 0.0
        %v353 = vunpack.c.l.s4 1983009808
        %v354 = vunpack.c.0.s8 %v353
        %v355 = vlaneseq
        %v356 = vshrl.u32 %v355, 7
        %v357 = vsub.s32 %v354, %v356
        %v358 = vrot.slane %v237, %v357
        %v360 = vunpack.c.l.s4 1983009808
        %v361 = vunpack.c.0.s8 %v360
        %v362 = vlaneseq
        %v363 = vshrl.u32 %v362, 7
        %v364 = vsub.s32 %v361, %v363
        %v365 = vrot.slane %v351, %v364
        %v366 = vcombine.high %v269, 0.0
        %v368 = vunpack.c.l.s4 1983009808
        %v369 = vunpack.c.0.s8 %v368
        %v370 = vlaneseq
        %v371 = vshrl.u32 %v370, 7
        %v372 = vsub.s32 %v369, %v371
        %v373 = vrot.slane %v269, %v372
        %v375 = vunpack.c.l.s4 1983009808
        %v376 = vunpack.c.0.s8 %v375
        %v377 = vlaneseq
        %v378 = vshrl.u32 %v377, 7
        %v379 = vsub.s32 %v376, %v378
        %v380 = vrot.slane %v366, %v379
        %v381 = vcombine.low %v358, %v373
        %v382 = vcombine.high %v358, %v373
        %v384 = vunpack.c.l.s4 1934713408
        %v385 = vunpack.c.0.s8 %v384
        %v386 = vlaneseq
        %v387 = vshrl.u32 %v386, 7
        %v388 = vsub.s32 %v385, %v387
        %v389 = vrot.slane %v381, %v388
        %v391 = vunpack.c.l.s4 1934713408
        %v392 = vunpack.c.0.s8 %v391
        %v393 = vlaneseq
        %v394 = vshrl.u32 %v393, 7
        %v395 = vsub.s32 %v392, %v394
        %v396 = vrot.slane %v382, %v395
        %v397 = vcombine.low %v365, %v380
        %v398 = vcombine.high %v365, %v380
        %v400 = vunpack.c.l.s4 1934713408
        %v401 = vunpack.c.0.s8 %v400
        %v402 = vlaneseq
        %v403 = vshrl.u32 %v402, 7
        %v404 = vsub.s32 %v401, %v403
        %v405 = vrot.slane %v397, %v404
        %v407 = vunpack.c.l.s4 1934713408
        %v408 = vunpack.c.0.s8 %v407
        %v409 = vlaneseq
        %v410 = vshrl.u32 %v409, 7
        %v411 = vsub.s32 %v408, %v410
        %v412 = vrot.slane %v398, %v411
        %v413 = vcombine.high %v389, 0.0
        %v414 = vcombine.high %v396, 0.0
        %v415 = vcombine.high %v405, 0.0
        %v416 = vcombine.high %v412, 0.0
        %417 = vxpose.xlu0.b32.start [1/16] %v323, 128
        %418 = vxpose.xlu0.b32.cont [2/16] 0.0, 128
        %419 = vxpose.xlu0.b32.cont [3/16] 0.0, 128
        %420 = vxpose.xlu0.b32.cont [4/16] 0.0, 128
        %421 = vxpose.xlu0.b32.cont [5/16] 0.0, 128
        %422 = vxpose.xlu0.b32.cont [6/16] 0.0, 128
        %423 = vxpose.xlu0.b32.cont [7/16] 0.0, 128
        %424 = vxpose.xlu0.b32.cont [8/16] 0.0, 128
        %425 = vxpose.xlu0.b32.cont [9/16] 0.0, 128
        %426 = vxpose.xlu0.b32.cont [10/16] 0.0, 128
        %427 = vxpose.xlu0.b32.cont [11/16] 0.0, 128
        %428 = vxpose.xlu0.b32.cont [12/16] 0.0, 128
        %429 = vxpose.xlu0.b32.cont [13/16] 0.0, 128
        %430 = vxpose.xlu0.b32.cont [14/16] 0.0, 128
        %431 = vxpose.xlu0.b32.cont [15/16] 0.0, 128
        %432 = vxpose.xlu0.b32.end [16/16] 0.0, 128
        %v433 = vpop.trf.xlu0
        %v434 = vpop.trf.xlu0
        %v435 = vpop.trf.xlu0
        %v436 = vpop.trf.xlu0
        %v437 = vpop.trf.xlu0
        %v438 = vpop.trf.xlu0
        %v439 = vpop.trf.xlu0
        %v440 = vpop.trf.xlu0
        %v441 = vpop.trf.xlu0
        %v442 = vpop.trf.xlu0
        %v443 = vpop.trf.xlu0
        %v444 = vpop.trf.xlu0
        %v445 = vpop.trf.xlu0
        %v446 = vpop.trf.xlu0
        %v447 = vpop.trf.xlu0
        %v448 = vpop.trf.xlu0
        %449 = vxpose.xlu0.b32.start [1/16] %v347, 128
        %450 = vxpose.xlu0.b32.cont [2/16] 0.0, 128
        %451 = vxpose.xlu0.b32.cont [3/16] 0.0, 128
        %452 = vxpose.xlu0.b32.cont [4/16] 0.0, 128
        %453 = vxpose.xlu0.b32.cont [5/16] 0.0, 128
        %454 = vxpose.xlu0.b32.cont [6/16] 0.0, 128
        %455 = vxpose.xlu0.b32.cont [7/16] 0.0, 128
        %456 = vxpose.xlu0.b32.cont [8/16] 0.0, 128
        %457 = vxpose.xlu0.b32.cont [9/16] 0.0, 128
        %458 = vxpose.xlu0.b32.cont [10/16] 0.0, 128
        %459 = vxpose.xlu0.b32.cont [11/16] 0.0, 128
        %460 = vxpose.xlu0.b32.cont [12/16] 0.0, 128
        %461 = vxpose.xlu0.b32.cont [13/16] 0.0, 128
        %462 = vxpose.xlu0.b32.cont [14/16] 0.0, 128
        %463 = vxpose.xlu0.b32.cont [15/16] 0.0, 128
        %464 = vxpose.xlu0.b32.end [16/16] 0.0, 128
        %v465 = vpop.trf.xlu0
        %v466 = vpop.trf.xlu0
        %v467 = vpop.trf.xlu0
        %v468 = vpop.trf.xlu0
        %v469 = vpop.trf.xlu0
        %v470 = vpop.trf.xlu0
        %v471 = vpop.trf.xlu0
        %v472 = vpop.trf.xlu0
        %v473 = vpop.trf.xlu0
        %v474 = vpop.trf.xlu0
        %v475 = vpop.trf.xlu0
        %v476 = vpop.trf.xlu0
        %v477 = vpop.trf.xlu0
        %v478 = vpop.trf.xlu0
        %v479 = vpop.trf.xlu0
        %v480 = vpop.trf.xlu0
        %481 = vxpose.xlu0.b32.start [1/16] %v330, 128
        %482 = vxpose.xlu0.b32.cont [2/16] 0.0, 128
        %483 = vxpose.xlu0.b32.cont [3/16] 0.0, 128
        %484 = vxpose.xlu0.b32.cont [4/16] 0.0, 128
        %485 = vxpose.xlu0.b32.cont [5/16] 0.0, 128
        %486 = vxpose.xlu0.b32.cont [6/16] 0.0, 128
        %487 = vxpose.xlu0.b32.cont [7/16] 0.0, 128
        %488 = vxpose.xlu0.b32.cont [8/16] 0.0, 128
        %489 = vxpose.xlu0.b32.cont [9/16] 0.0, 128
        %490 = vxpose.xlu0.b32.cont [10/16] 0.0, 128
        %491 = vxpose.xlu0.b32.cont [11/16] 0.0, 128
        %492 = vxpose.xlu0.b32.cont [12/16] 0.0, 128
        %493 = vxpose.xlu0.b32.cont [13/16] 0.0, 128
        %494 = vxpose.xlu0.b32.cont [14/16] 0.0, 128
        %495 = vxpose.xlu0.b32.cont [15/16] 0.0, 128
        %496 = vxpose.xlu0.b32.end [16/16] 0.0, 128
        %v497 = vpop.trf.xlu0
        %v498 = vpop.trf.xlu0
        %v499 = vpop.trf.xlu0
        %v500 = vpop.trf.xlu0
        %v501 = vpop.trf.xlu0
        %v502 = vpop.trf.xlu0
        %v503 = vpop.trf.xlu0
        %v504 = vpop.trf.xlu0
        %v505 = vpop.trf.xlu0
        %v506 = vpop.trf.xlu0
        %v507 = vpop.trf.xlu0
        %v508 = vpop.trf.xlu0
        %v509 = vpop.trf.xlu0
        %v510 = vpop.trf.xlu0
        %v511 = vpop.trf.xlu0
        %v512 = vpop.trf.xlu0
        %513 = vxpose.xlu0.b32.start [1/16] %v348, 128
        %514 = vxpose.xlu0.b32.cont [2/16] 0.0, 128
        %515 = vxpose.xlu0.b32.cont [3/16] 0.0, 128
        %516 = vxpose.xlu0.b32.cont [4/16] 0.0, 128
        %517 = vxpose.xlu0.b32.cont [5/16] 0.0, 128
        %518 = vxpose.xlu0.b32.cont [6/16] 0.0, 128
        %519 = vxpose.xlu0.b32.cont [7/16] 0.0, 128
        %520 = vxpose.xlu0.b32.cont [8/16] 0.0, 128
        %521 = vxpose.xlu0.b32.cont [9/16] 0.0, 128
        %522 = vxpose.xlu0.b32.cont [10/16] 0.0, 128
        %523 = vxpose.xlu0.b32.cont [11/16] 0.0, 128
        %524 = vxpose.xlu0.b32.cont [12/16] 0.0, 128
        %525 = vxpose.xlu0.b32.cont [13/16] 0.0, 128
        %526 = vxpose.xlu0.b32.cont [14/16] 0.0, 128
        %527 = vxpose.xlu0.b32.cont [15/16] 0.0, 128
        %528 = vxpose.xlu0.b32.end [16/16] 0.0, 128
        %v529 = vpop.trf.xlu0
        %v530 = vpop.trf.xlu0
        %v531 = vpop.trf.xlu0
        %v532 = vpop.trf.xlu0
        %v533 = vpop.trf.xlu0
        %v534 = vpop.trf.xlu0
        %v535 = vpop.trf.xlu0
        %v536 = vpop.trf.xlu0
        %v537 = vpop.trf.xlu0
        %v538 = vpop.trf.xlu0
        %v539 = vpop.trf.xlu0
        %v540 = vpop.trf.xlu0
        %v541 = vpop.trf.xlu0
        %v542 = vpop.trf.xlu0
        %v543 = vpop.trf.xlu0
        %v544 = vpop.trf.xlu0
        %545 = vxpose.xlu0.b32.start [1/16] %v339, 128
        %546 = vxpose.xlu0.b32.cont [2/16] 0.0, 128
        %547 = vxpose.xlu0.b32.cont [3/16] 0.0, 128
        %548 = vxpose.xlu0.b32.cont [4/16] 0.0, 128
        %549 = vxpose.xlu0.b32.cont [5/16] 0.0, 128
        %550 = vxpose.xlu0.b32.cont [6/16] 0.0, 128
        %551 = vxpose.xlu0.b32.cont [7/16] 0.0, 128
        %552 = vxpose.xlu0.b32.cont [8/16] 0.0, 128
        %553 = vxpose.xlu0.b32.cont [9/16] 0.0, 128
        %554 = vxpose.xlu0.b32.cont [10/16] 0.0, 128
        %555 = vxpose.xlu0.b32.cont [11/16] 0.0, 128
        %556 = vxpose.xlu0.b32.cont [12/16] 0.0, 128
        %557 = vxpose.xlu0.b32.cont [13/16] 0.0, 128
        %558 = vxpose.xlu0.b32.cont [14/16] 0.0, 128
        %559 = vxpose.xlu0.b32.cont [15/16] 0.0, 128
        %560 = vxpose.xlu0.b32.end [16/16] 0.0, 128
        %v561 = vpop.trf.xlu0
        %v562 = vpop.trf.xlu0
        %v563 = vpop.trf.xlu0
        %v564 = vpop.trf.xlu0
        %v565 = vpop.trf.xlu0
        %v566 = vpop.trf.xlu0
        %v567 = vpop.trf.xlu0
        %v568 = vpop.trf.xlu0
        %v569 = vpop.trf.xlu0
        %v570 = vpop.trf.xlu0
        %v571 = vpop.trf.xlu0
        %v572 = vpop.trf.xlu0
        %v573 = vpop.trf.xlu0
        %v574 = vpop.trf.xlu0
        %v575 = vpop.trf.xlu0
        %v576 = vpop.trf.xlu0
        %577 = vxpose.xlu0.b32.start [1/16] %v349, 128
        %578 = vxpose.xlu0.b32.cont [2/16] 0.0, 128
        %579 = vxpose.xlu0.b32.cont [3/16] 0.0, 128
        %580 = vxpose.xlu0.b32.cont [4/16] 0.0, 128
        %581 = vxpose.xlu0.b32.cont [5/16] 0.0, 128
        %582 = vxpose.xlu0.b32.cont [6/16] 0.0, 128
        %583 = vxpose.xlu0.b32.cont [7/16] 0.0, 128
        %584 = vxpose.xlu0.b32.cont [8/16] 0.0, 128
        %585 = vxpose.xlu0.b32.cont [9/16] 0.0, 128
        %586 = vxpose.xlu0.b32.cont [10/16] 0.0, 128
        %587 = vxpose.xlu0.b32.cont [11/16] 0.0, 128
        %588 = vxpose.xlu0.b32.cont [12/16] 0.0, 128
        %589 = vxpose.xlu0.b32.cont [13/16] 0.0, 128
        %590 = vxpose.xlu0.b32.cont [14/16] 0.0, 128
        %591 = vxpose.xlu0.b32.cont [15/16] 0.0, 128
        %592 = vxpose.xlu0.b32.end [16/16] 0.0, 128
        %v593 = vpop.trf.xlu0
        %v594 = vpop.trf.xlu0
        %v595 = vpop.trf.xlu0
        %v596 = vpop.trf.xlu0
        %v597 = vpop.trf.xlu0
        %v598 = vpop.trf.xlu0
        %v599 = vpop.trf.xlu0
        %v600 = vpop.trf.xlu0
        %v601 = vpop.trf.xlu0
        %v602 = vpop.trf.xlu0
        %v603 = vpop.trf.xlu0
        %v604 = vpop.trf.xlu0
        %v605 = vpop.trf.xlu0
        %v606 = vpop.trf.xlu0
        %v607 = vpop.trf.xlu0
        %v608 = vpop.trf.xlu0
        %609 = vxpose.xlu0.b32.start [1/16] %v346, 128
        %610 = vxpose.xlu0.b32.cont [2/16] 0.0, 128
        %611 = vxpose.xlu0.b32.cont [3/16] 0.0, 128
        %612 = vxpose.xlu0.b32.cont [4/16] 0.0, 128
        %613 = vxpose.xlu0.b32.cont [5/16] 0.0, 128
        %614 = vxpose.xlu0.b32.cont [6/16] 0.0, 128
        %615 = vxpose.xlu0.b32.cont [7/16] 0.0, 128
        %616 = vxpose.xlu0.b32.cont [8/16] 0.0, 128
        %617 = vxpose.xlu0.b32.cont [9/16] 0.0, 128
        %618 = vxpose.xlu0.b32.cont [10/16] 0.0, 128
        %619 = vxpose.xlu0.b32.cont [11/16] 0.0, 128
        %620 = vxpose.xlu0.b32.cont [12/16] 0.0, 128
        %621 = vxpose.xlu0.b32.cont [13/16] 0.0, 128
        %622 = vxpose.xlu0.b32.cont [14/16] 0.0, 128
        %623 = vxpose.xlu0.b32.cont [15/16] 0.0, 128
        %624 = vxpose.xlu0.b32.end [16/16] 0.0, 128
        %v625 = vpop.trf.xlu0
        %v626 = vpop.trf.xlu0
        %v627 = vpop.trf.xlu0
        %v628 = vpop.trf.xlu0
        %v629 = vpop.trf.xlu0
        %v630 = vpop.trf.xlu0
        %v631 = vpop.trf.xlu0
        %v632 = vpop.trf.xlu0
        %v633 = vpop.trf.xlu0
        %v634 = vpop.trf.xlu0
        %v635 = vpop.trf.xlu0
        %v636 = vpop.trf.xlu0
        %v637 = vpop.trf.xlu0
        %v638 = vpop.trf.xlu0
        %v639 = vpop.trf.xlu0
        %v640 = vpop.trf.xlu0
        %641 = vxpose.xlu0.b32.start [1/16] %v350, 128
        %642 = vxpose.xlu0.b32.cont [2/16] 0.0, 128
        %643 = vxpose.xlu0.b32.cont [3/16] 0.0, 128
        %644 = vxpose.xlu0.b32.cont [4/16] 0.0, 128
        %645 = vxpose.xlu0.b32.cont [5/16] 0.0, 128
        %646 = vxpose.xlu0.b32.cont [6/16] 0.0, 128
        %647 = vxpose.xlu0.b32.cont [7/16] 0.0, 128
        %648 = vxpose.xlu0.b32.cont [8/16] 0.0, 128
        %649 = vxpose.xlu0.b32.cont [9/16] 0.0, 128
        %650 = vxpose.xlu0.b32.cont [10/16] 0.0, 128
        %651 = vxpose.xlu0.b32.cont [11/16] 0.0, 128
        %652 = vxpose.xlu0.b32.cont [12/16] 0.0, 128
        %653 = vxpose.xlu0.b32.cont [13/16] 0.0, 128
        %654 = vxpose.xlu0.b32.cont [14/16] 0.0, 128
        %655 = vxpose.xlu0.b32.cont [15/16] 0.0, 128
        %656 = vxpose.xlu0.b32.end [16/16] 0.0, 128
        %v657 = vpop.trf.xlu0
        %v658 = vpop.trf.xlu0
        %v659 = vpop.trf.xlu0
        %v660 = vpop.trf.xlu0
        %v661 = vpop.trf.xlu0
        %v662 = vpop.trf.xlu0
        %v663 = vpop.trf.xlu0
        %v664 = vpop.trf.xlu0
        %v665 = vpop.trf.xlu0
        %v666 = vpop.trf.xlu0
        %v667 = vpop.trf.xlu0
        %v668 = vpop.trf.xlu0
        %v669 = vpop.trf.xlu0
        %v670 = vpop.trf.xlu0
        %v671 = vpop.trf.xlu0
        %v672 = vpop.trf.xlu0
        %673 = vxpose.xlu0.b32.start [1/16] %v389, 128
        %674 = vxpose.xlu0.b32.cont [2/16] 0.0, 128
        %675 = vxpose.xlu0.b32.cont [3/16] 0.0, 128
        %676 = vxpose.xlu0.b32.cont [4/16] 0.0, 128
        %677 = vxpose.xlu0.b32.cont [5/16] 0.0, 128
        %678 = vxpose.xlu0.b32.cont [6/16] 0.0, 128
        %679 = vxpose.xlu0.b32.cont [7/16] 0.0, 128
        %680 = vxpose.xlu0.b32.cont [8/16] 0.0, 128
        %681 = vxpose.xlu0.b32.cont [9/16] 0.0, 128
        %682 = vxpose.xlu0.b32.cont [10/16] 0.0, 128
        %683 = vxpose.xlu0.b32.cont [11/16] 0.0, 128
        %684 = vxpose.xlu0.b32.cont [12/16] 0.0, 128
        %685 = vxpose.xlu0.b32.cont [13/16] 0.0, 128
        %686 = vxpose.xlu0.b32.cont [14/16] 0.0, 128
        %687 = vxpose.xlu0.b32.cont [15/16] 0.0, 128
        %688 = vxpose.xlu0.b32.end [16/16] 0.0, 128
        %v689 = vpop.trf.xlu0
        %v690 = vpop.trf.xlu0
        %v691 = vpop.trf.xlu0
        %v692 = vpop.trf.xlu0
        %v693 = vpop.trf.xlu0
        %v694 = vpop.trf.xlu0
        %v695 = vpop.trf.xlu0
        %v696 = vpop.trf.xlu0
        %v697 = vpop.trf.xlu0
        %v698 = vpop.trf.xlu0
        %v699 = vpop.trf.xlu0
        %v700 = vpop.trf.xlu0
        %v701 = vpop.trf.xlu0
        %v702 = vpop.trf.xlu0
        %v703 = vpop.trf.xlu0
        %v704 = vpop.trf.xlu0
        %705 = vxpose.xlu0.b32.start [1/16] %v413, 128
        %706 = vxpose.xlu0.b32.cont [2/16] 0.0, 128
        %707 = vxpose.xlu0.b32.cont [3/16] 0.0, 128
        %708 = vxpose.xlu0.b32.cont [4/16] 0.0, 128
        %709 = vxpose.xlu0.b32.cont [5/16] 0.0, 128
        %710 = vxpose.xlu0.b32.cont [6/16] 0.0, 128
        %711 = vxpose.xlu0.b32.cont [7/16] 0.0, 128
        %712 = vxpose.xlu0.b32.cont [8/16] 0.0, 128
        %713 = vxpose.xlu0.b32.cont [9/16] 0.0, 128
        %714 = vxpose.xlu0.b32.cont [10/16] 0.0, 128
        %715 = vxpose.xlu0.b32.cont [11/16] 0.0, 128
        %716 = vxpose.xlu0.b32.cont [12/16] 0.0, 128
        %717 = vxpose.xlu0.b32.cont [13/16] 0.0, 128
        %718 = vxpose.xlu0.b32.cont [14/16] 0.0, 128
        %719 = vxpose.xlu0.b32.cont [15/16] 0.0, 128
        %720 = vxpose.xlu0.b32.end [16/16] 0.0, 128
        %v721 = vpop.trf.xlu0
        %v722 = vpop.trf.xlu0
        %v723 = vpop.trf.xlu0
        %v724 = vpop.trf.xlu0
        %v725 = vpop.trf.xlu0
        %v726 = vpop.trf.xlu0
        %v727 = vpop.trf.xlu0
        %v728 = vpop.trf.xlu0
        %v729 = vpop.trf.xlu0
        %v730 = vpop.trf.xlu0
        %v731 = vpop.trf.xlu0
        %v732 = vpop.trf.xlu0
        %v733 = vpop.trf.xlu0
        %v734 = vpop.trf.xlu0
        %v735 = vpop.trf.xlu0
        %v736 = vpop.trf.xlu0
        %737 = vxpose.xlu0.b32.start [1/16] %v396, 128
        %738 = vxpose.xlu0.b32.cont [2/16] 0.0, 128
        %739 = vxpose.xlu0.b32.cont [3/16] 0.0, 128
        %740 = vxpose.xlu0.b32.cont [4/16] 0.0, 128
        %741 = vxpose.xlu0.b32.cont [5/16] 0.0, 128
        %742 = vxpose.xlu0.b32.cont [6/16] 0.0, 128
        %743 = vxpose.xlu0.b32.cont [7/16] 0.0, 128
        %744 = vxpose.xlu0.b32.cont [8/16] 0.0, 128
        %745 = vxpose.xlu0.b32.cont [9/16] 0.0, 128
        %746 = vxpose.xlu0.b32.cont [10/16] 0.0, 128
        %747 = vxpose.xlu0.b32.cont [11/16] 0.0, 128
        %748 = vxpose.xlu0.b32.cont [12/16] 0.0, 128
        %749 = vxpose.xlu0.b32.cont [13/16] 0.0, 128
        %750 = vxpose.xlu0.b32.cont [14/16] 0.0, 128
        %751 = vxpose.xlu0.b32.cont [15/16] 0.0, 128
        %752 = vxpose.xlu0.b32.end [16/16] 0.0, 128
        %v753 = vpop.trf.xlu0
        %v754 = vpop.trf.xlu0
        %v755 = vpop.trf.xlu0
        %v756 = vpop.trf.xlu0
        %v757 = vpop.trf.xlu0
        %v758 = vpop.trf.xlu0
        %v759 = vpop.trf.xlu0
        %v760 = vpop.trf.xlu0
        %v761 = vpop.trf.xlu0
        %v762 = vpop.trf.xlu0
        %v763 = vpop.trf.xlu0
        %v764 = vpop.trf.xlu0
        %v765 = vpop.trf.xlu0
        %v766 = vpop.trf.xlu0
        %v767 = vpop.trf.xlu0
        %v768 = vpop.trf.xlu0
        %769 = vxpose.xlu0.b32.start [1/16] %v414, 128
        %770 = vxpose.xlu0.b32.cont [2/16] 0.0, 128
        %771 = vxpose.xlu0.b32.cont [3/16] 0.0, 128
        %772 = vxpose.xlu0.b32.cont [4/16] 0.0, 128
        %773 = vxpose.xlu0.b32.cont [5/16] 0.0, 128
        %774 = vxpose.xlu0.b32.cont [6/16] 0.0, 128
        %775 = vxpose.xlu0.b32.cont [7/16] 0.0, 128
        %776 = vxpose.xlu0.b32.cont [8/16] 0.0, 128
        %777 = vxpose.xlu0.b32.cont [9/16] 0.0, 128
        %778 = vxpose.xlu0.b32.cont [10/16] 0.0, 128
        %779 = vxpose.xlu0.b32.cont [11/16] 0.0, 128
        %780 = vxpose.xlu0.b32.cont [12/16] 0.0, 128
        %781 = vxpose.xlu0.b32.cont [13/16] 0.0, 128
        %782 = vxpose.xlu0.b32.cont [14/16] 0.0, 128
        %783 = vxpose.xlu0.b32.cont [15/16] 0.0, 128
        %784 = vxpose.xlu0.b32.end [16/16] 0.0, 128
        %v785 = vpop.trf.xlu0
        %v786 = vpop.trf.xlu0
        %v787 = vpop.trf.xlu0
        %v788 = vpop.trf.xlu0
        %v789 = vpop.trf.xlu0
        %v790 = vpop.trf.xlu0
        %v791 = vpop.trf.xlu0
        %v792 = vpop.trf.xlu0
        %v793 = vpop.trf.xlu0
        %v794 = vpop.trf.xlu0
        %v795 = vpop.trf.xlu0
        %v796 = vpop.trf.xlu0
        %v797 = vpop.trf.xlu0
        %v798 = vpop.trf.xlu0
        %v799 = vpop.trf.xlu0
        %v800 = vpop.trf.xlu0
        %801 = vxpose.xlu0.b32.start [1/16] %v405, 128
        %802 = vxpose.xlu0.b32.cont [2/16] 0.0, 128
        %803 = vxpose.xlu0.b32.cont [3/16] 0.0, 128
        %804 = vxpose.xlu0.b32.cont [4/16] 0.0, 128
        %805 = vxpose.xlu0.b32.cont [5/16] 0.0, 128
        %806 = vxpose.xlu0.b32.cont [6/16] 0.0, 128
        %807 = vxpose.xlu0.b32.cont [7/16] 0.0, 128
        %808 = vxpose.xlu0.b32.cont [8/16] 0.0, 128
        %809 = vxpose.xlu0.b32.cont [9/16] 0.0, 128
        %810 = vxpose.xlu0.b32.cont [10/16] 0.0, 128
        %811 = vxpose.xlu0.b32.cont [11/16] 0.0, 128
        %812 = vxpose.xlu0.b32.cont [12/16] 0.0, 128
        %813 = vxpose.xlu0.b32.cont [13/16] 0.0, 128
        %814 = vxpose.xlu0.b32.cont [14/16] 0.0, 128
        %815 = vxpose.xlu0.b32.cont [15/16] 0.0, 128
        %816 = vxpose.xlu0.b32.end [16/16] 0.0, 128
        %v817 = vpop.trf.xlu0
        %v818 = vpop.trf.xlu0
        %v819 = vpop.trf.xlu0
        %v820 = vpop.trf.xlu0
        %v821 = vpop.trf.xlu0
        %v822 = vpop.trf.xlu0
        %v823 = vpop.trf.xlu0
        %v824 = vpop.trf.xlu0
        %v825 = vpop.trf.xlu0
        %v826 = vpop.trf.xlu0
        %v827 = vpop.trf.xlu0
        %v828 = vpop.trf.xlu0
        %v829 = vpop.trf.xlu0
        %v830 = vpop.trf.xlu0
        %v831 = vpop.trf.xlu0
        %v832 = vpop.trf.xlu0
        %833 = vxpose.xlu0.b32.start [1/16] %v415, 128
        %834 = vxpose.xlu0.b32.cont [2/16] 0.0, 128
        %835 = vxpose.xlu0.b32.cont [3/16] 0.0, 128
        %836 = vxpose.xlu0.b32.cont [4/16] 0.0, 128
        %837 = vxpose.xlu0.b32.cont [5/16] 0.0, 128
        %838 = vxpose.xlu0.b32.cont [6/16] 0.0, 128
        %839 = vxpose.xlu0.b32.cont [7/16] 0.0, 128
        %840 = vxpose.xlu0.b32.cont [8/16] 0.0, 128
        %841 = vxpose.xlu0.b32.cont [9/16] 0.0, 128
        %842 = vxpose.xlu0.b32.cont [10/16] 0.0, 128
        %843 = vxpose.xlu0.b32.cont [11/16] 0.0, 128
        %844 = vxpose.xlu0.b32.cont [12/16] 0.0, 128
        %845 = vxpose.xlu0.b32.cont [13/16] 0.0, 128
        %846 = vxpose.xlu0.b32.cont [14/16] 0.0, 128
        %847 = vxpose.xlu0.b32.cont [15/16] 0.0, 128
        %848 = vxpose.xlu0.b32.end [16/16] 0.0, 128
        %v849 = vpop.trf.xlu0
        %v850 = vpop.trf.xlu0
        %v851 = vpop.trf.xlu0
        %v852 = vpop.trf.xlu0
        %v853 = vpop.trf.xlu0
        %v854 = vpop.trf.xlu0
        %v855 = vpop.trf.xlu0
        %v856 = vpop.trf.xlu0
        %v857 = vpop.trf.xlu0
        %v858 = vpop.trf.xlu0
        %v859 = vpop.trf.xlu0
        %v860 = vpop.trf.xlu0
        %v861 = vpop.trf.xlu0
        %v862 = vpop.trf.xlu0
        %v863 = vpop.trf.xlu0
        %v864 = vpop.trf.xlu0
        %865 = vxpose.xlu0.b32.start [1/16] %v412, 128
        %866 = vxpose.xlu0.b32.cont [2/16] 0.0, 128
        %867 = vxpose.xlu0.b32.cont [3/16] 0.0, 128
        %868 = vxpose.xlu0.b32.cont [4/16] 0.0, 128
        %869 = vxpose.xlu0.b32.cont [5/16] 0.0, 128
        %870 = vxpose.xlu0.b32.cont [6/16] 0.0, 128
        %871 = vxpose.xlu0.b32.cont [7/16] 0.0, 128
        %872 = vxpose.xlu0.b32.cont [8/16] 0.0, 128
        %873 = vxpose.xlu0.b32.cont [9/16] 0.0, 128
        %874 = vxpose.xlu0.b32.cont [10/16] 0.0, 128
        %875 = vxpose.xlu0.b32.cont [11/16] 0.0, 128
        %876 = vxpose.xlu0.b32.cont [12/16] 0.0, 128
        %877 = vxpose.xlu0.b32.cont [13/16] 0.0, 128
        %878 = vxpose.xlu0.b32.cont [14/16] 0.0, 128
        %879 = vxpose.xlu0.b32.cont [15/16] 0.0, 128
        %880 = vxpose.xlu0.b32.end [16/16] 0.0, 128
        %v881 = vpop.trf.xlu0
        %v882 = vpop.trf.xlu0
        %v883 = vpop.trf.xlu0
        %v884 = vpop.trf.xlu0
        %v885 = vpop.trf.xlu0
        %v886 = vpop.trf.xlu0
        %v887 = vpop.trf.xlu0
        %v888 = vpop.trf.xlu0
        %v889 = vpop.trf.xlu0
        %v890 = vpop.trf.xlu0
        %v891 = vpop.trf.xlu0
        %v892 = vpop.trf.xlu0
        %v893 = vpop.trf.xlu0
        %v894 = vpop.trf.xlu0
        %v895 = vpop.trf.xlu0
        %v896 = vpop.trf.xlu0
        %897 = vxpose.xlu0.b32.start [1/16] %v416, 128
        %898 = vxpose.xlu0.b32.cont [2/16] 0.0, 128
        %899 = vxpose.xlu0.b32.cont [3/16] 0.0, 128
        %900 = vxpose.xlu0.b32.cont [4/16] 0.0, 128
        %901 = vxpose.xlu0.b32.cont [5/16] 0.0, 128
        %902 = vxpose.xlu0.b32.cont [6/16] 0.0, 128
        %903 = vxpose.xlu0.b32.cont [7/16] 0.0, 128
        %904 = vxpose.xlu0.b32.cont [8/16] 0.0, 128
        %905 = vxpose.xlu0.b32.cont [9/16] 0.0, 128
        %906 = vxpose.xlu0.b32.cont [10/16] 0.0, 128
        %907 = vxpose.xlu0.b32.cont [11/16] 0.0, 128
        %908 = vxpose.xlu0.b32.cont [12/16] 0.0, 128
        %909 = vxpose.xlu0.b32.cont [13/16] 0.0, 128
        %910 = vxpose.xlu0.b32.cont [14/16] 0.0, 128
        %911 = vxpose.xlu0.b32.cont [15/16] 0.0, 128
        %912 = vxpose.xlu0.b32.end [16/16] 0.0, 128
        %v913 = vpop.trf.xlu0
        %v914 = vpop.trf.xlu0
        %v915 = vpop.trf.xlu0
        %v916 = vpop.trf.xlu0
        %v917 = vpop.trf.xlu0
        %v918 = vpop.trf.xlu0
        %v919 = vpop.trf.xlu0
        %v920 = vpop.trf.xlu0
        %v921 = vpop.trf.xlu0
        %v922 = vpop.trf.xlu0
        %v923 = vpop.trf.xlu0
        %v924 = vpop.trf.xlu0
        %v925 = vpop.trf.xlu0
        %v926 = vpop.trf.xlu0
        %v927 = vpop.trf.xlu0
        %v928 = vpop.trf.xlu0
        %v929 = vcombine.low %v433, %v497
        %v930 = vcombine.high %v433, %v497
        %v932 = vunpack.c.l.s4 1983009808
        %v933 = vunpack.c.0.s8 %v932
        %v934 = vlaneseq
        %v935 = vshrl.u32 %v934, 7
        %v936 = vsub.s32 %v933, %v935
        %v937 = vrot.slane %v929, %v936
        %v939 = vunpack.c.l.s4 1983009808
        %v940 = vunpack.c.0.s8 %v939
        %v941 = vlaneseq
        %v942 = vshrl.u32 %v941, 7
        %v943 = vsub.s32 %v940, %v942
        %v944 = vrot.slane %v930, %v943
        %v945 = vcombine.low %v465, %v529
        %v946 = vcombine.high %v465, %v529
        %v948 = vunpack.c.l.s4 1983009808
        %v949 = vunpack.c.0.s8 %v948
        %v950 = vlaneseq
        %v951 = vshrl.u32 %v950, 7
        %v952 = vsub.s32 %v949, %v951
        %v953 = vrot.slane %v945, %v952
        %v955 = vunpack.c.l.s4 1983009808
        %v956 = vunpack.c.0.s8 %v955
        %v957 = vlaneseq
        %v958 = vshrl.u32 %v957, 7
        %v959 = vsub.s32 %v956, %v958
        %v960 = vrot.slane %v946, %v959
        %v961 = vcombine.low %v561, %v625
        %v962 = vcombine.high %v561, %v625
        %v964 = vunpack.c.l.s4 1983009808
        %v965 = vunpack.c.0.s8 %v964
        %v966 = vlaneseq
        %v967 = vshrl.u32 %v966, 7
        %v968 = vsub.s32 %v965, %v967
        %v969 = vrot.slane %v961, %v968
        %v971 = vunpack.c.l.s4 1983009808
        %v972 = vunpack.c.0.s8 %v971
        %v973 = vlaneseq
        %v974 = vshrl.u32 %v973, 7
        %v975 = vsub.s32 %v972, %v974
        %v976 = vrot.slane %v962, %v975
        %v977 = vcombine.low %v593, %v657
        %v978 = vcombine.high %v593, %v657
        %v980 = vunpack.c.l.s4 1983009808
        %v981 = vunpack.c.0.s8 %v980
        %v982 = vlaneseq
        %v983 = vshrl.u32 %v982, 7
        %v984 = vsub.s32 %v981, %v983
        %v985 = vrot.slane %v977, %v984
        %v987 = vunpack.c.l.s4 1983009808
        %v988 = vunpack.c.0.s8 %v987
        %v989 = vlaneseq
        %v990 = vshrl.u32 %v989, 7
        %v991 = vsub.s32 %v988, %v990
        %v992 = vrot.slane %v978, %v991
        %v993 = vcombine.low %v937, %v953
        %v994 = vcombine.high %v937, %v953
        %v996 = vunpack.c.l.s4 1934713408
        %v997 = vunpack.c.0.s8 %v996
        %v998 = vlaneseq
        %v999 = vshrl.u32 %v998, 7
        %v1000 = vsub.s32 %v997, %v999
        %v1001 = vrot.slane %v993, %v1000
        %v1003 = vunpack.c.l.s4 1934713408
        %v1004 = vunpack.c.0.s8 %v1003
        %v1005 = vlaneseq
        %v1006 = vshrl.u32 %v1005, 7
        %v1007 = vsub.s32 %v1004, %v1006
        %v1008 = vrot.slane %v994, %v1007
        %v1009 = vcombine.low %v944, %v960
        %v1010 = vcombine.high %v944, %v960
        %v1012 = vunpack.c.l.s4 1934713408
        %v1013 = vunpack.c.0.s8 %v1012
        %v1014 = vlaneseq
        %v1015 = vshrl.u32 %v1014, 7
        %v1016 = vsub.s32 %v1013, %v1015
        %v1017 = vrot.slane %v1009, %v1016
        %v1019 = vunpack.c.l.s4 1934713408
        %v1020 = vunpack.c.0.s8 %v1019
        %v1021 = vlaneseq
        %v1022 = vshrl.u32 %v1021, 7
        %v1023 = vsub.s32 %v1020, %v1022
        %v1024 = vrot.slane %v1010, %v1023
        %v1025 = vcombine.low %v969, %v985
        %v1026 = vcombine.high %v969, %v985
        %v1028 = vunpack.c.l.s4 1934713408
        %v1029 = vunpack.c.0.s8 %v1028
        %v1030 = vlaneseq
        %v1031 = vshrl.u32 %v1030, 7
        %v1032 = vsub.s32 %v1029, %v1031
        %v1033 = vrot.slane %v1025, %v1032
        %v1035 = vunpack.c.l.s4 1934713408
        %v1036 = vunpack.c.0.s8 %v1035
        %v1037 = vlaneseq
        %v1038 = vshrl.u32 %v1037, 7
        %v1039 = vsub.s32 %v1036, %v1038
        %v1040 = vrot.slane %v1026, %v1039
        %v1041 = vcombine.low %v976, %v992
        %v1042 = vcombine.high %v976, %v992
        %v1044 = vunpack.c.l.s4 1934713408
        %v1045 = vunpack.c.0.s8 %v1044
        %v1046 = vlaneseq
        %v1047 = vshrl.u32 %v1046, 7
        %v1048 = vsub.s32 %v1045, %v1047
        %v1049 = vrot.slane %v1041, %v1048
        %v1051 = vunpack.c.l.s4 1934713408
        %v1052 = vunpack.c.0.s8 %v1051
        %v1053 = vlaneseq
        %v1054 = vshrl.u32 %v1053, 7
        %v1055 = vsub.s32 %v1052, %v1054
        %v1056 = vrot.slane %v1042, %v1055
        %v1057 = vcombine.low %v1001, %v1033
        %v1058 = vcombine.high %v1001, %v1033
        %v1059 = vcombine.low %v1008, %v1040
        %v1060 = vcombine.high %v1008, %v1040
        %v1061 = vcombine.low %v1017, %v1049
        %v1062 = vcombine.high %v1017, %v1049
        %v1063 = vcombine.low %v1024, %v1056
        %v1064 = vcombine.high %v1024, %v1056
        %v1065 = vcombine.low %v689, %v753
        %v1066 = vcombine.high %v689, %v753
        %v1068 = vunpack.c.l.s4 1983009808
        %v1069 = vunpack.c.0.s8 %v1068
        %v1070 = vlaneseq
        %v1071 = vshrl.u32 %v1070, 7
        %v1072 = vsub.s32 %v1069, %v1071
        %v1073 = vrot.slane %v1065, %v1072
        %v1075 = vunpack.c.l.s4 1983009808
        %v1076 = vunpack.c.0.s8 %v1075
        %v1077 = vlaneseq
        %v1078 = vshrl.u32 %v1077, 7
        %v1079 = vsub.s32 %v1076, %v1078
        %v1080 = vrot.slane %v1066, %v1079
        %v1081 = vcombine.low %v721, %v785
        %v1082 = vcombine.high %v721, %v785
        %v1084 = vunpack.c.l.s4 1983009808
        %v1085 = vunpack.c.0.s8 %v1084
        %v1086 = vlaneseq
        %v1087 = vshrl.u32 %v1086, 7
        %v1088 = vsub.s32 %v1085, %v1087
        %v1089 = vrot.slane %v1081, %v1088
        %v1091 = vunpack.c.l.s4 1983009808
        %v1092 = vunpack.c.0.s8 %v1091
        %v1093 = vlaneseq
        %v1094 = vshrl.u32 %v1093, 7
        %v1095 = vsub.s32 %v1092, %v1094
        %v1096 = vrot.slane %v1082, %v1095
        %v1097 = vcombine.low %v817, %v881
        %v1098 = vcombine.high %v817, %v881
        %v1100 = vunpack.c.l.s4 1983009808
        %v1101 = vunpack.c.0.s8 %v1100
        %v1102 = vlaneseq
        %v1103 = vshrl.u32 %v1102, 7
        %v1104 = vsub.s32 %v1101, %v1103
        %v1105 = vrot.slane %v1097, %v1104
        %v1107 = vunpack.c.l.s4 1983009808
        %v1108 = vunpack.c.0.s8 %v1107
        %v1109 = vlaneseq
        %v1110 = vshrl.u32 %v1109, 7
        %v1111 = vsub.s32 %v1108, %v1110
        %v1112 = vrot.slane %v1098, %v1111
        %v1113 = vcombine.low %v849, %v913
        %v1114 = vcombine.high %v849, %v913
        %v1116 = vunpack.c.l.s4 1983009808
        %v1117 = vunpack.c.0.s8 %v1116
        %v1118 = vlaneseq
        %v1119 = vshrl.u32 %v1118, 7
        %v1120 = vsub.s32 %v1117, %v1119
        %v1121 = vrot.slane %v1113, %v1120
        %v1123 = vunpack.c.l.s4 1983009808
        %v1124 = vunpack.c.0.s8 %v1123
        %v1125 = vlaneseq
        %v1126 = vshrl.u32 %v1125, 7
        %v1127 = vsub.s32 %v1124, %v1126
        %v1128 = vrot.slane %v1114, %v1127
        %v1129 = vcombine.low %v1073, %v1089
        %v1130 = vcombine.high %v1073, %v1089
        %v1132 = vunpack.c.l.s4 1934713408
        %v1133 = vunpack.c.0.s8 %v1132
        %v1134 = vlaneseq
        %v1135 = vshrl.u32 %v1134, 7
        %v1136 = vsub.s32 %v1133, %v1135
        %v1137 = vrot.slane %v1129, %v1136
        %v1139 = vunpack.c.l.s4 1934713408
        %v1140 = vunpack.c.0.s8 %v1139
        %v1141 = vlaneseq
        %v1142 = vshrl.u32 %v1141, 7
        %v1143 = vsub.s32 %v1140, %v1142
        %v1144 = vrot.slane %v1130, %v1143
        %v1145 = vcombine.low %v1080, %v1096
        %v1146 = vcombine.high %v1080, %v1096
        %v1148 = vunpack.c.l.s4 1934713408
        %v1149 = vunpack.c.0.s8 %v1148
        %v1150 = vlaneseq
        %v1151 = vshrl.u32 %v1150, 7
        %v1152 = vsub.s32 %v1149, %v1151
        %v1153 = vrot.slane %v1145, %v1152
        %v1155 = vunpack.c.l.s4 1934713408
        %v1156 = vunpack.c.0.s8 %v1155
        %v1157 = vlaneseq
        %v1158 = vshrl.u32 %v1157, 7
        %v1159 = vsub.s32 %v1156, %v1158
        %v1160 = vrot.slane %v1146, %v1159
        %v1161 = vcombine.low %v1105, %v1121
        %v1162 = vcombine.high %v1105, %v1121
        %v1164 = vunpack.c.l.s4 1934713408
        %v1165 = vunpack.c.0.s8 %v1164
        %v1166 = vlaneseq
        %v1167 = vshrl.u32 %v1166, 7
        %v1168 = vsub.s32 %v1165, %v1167
        %v1169 = vrot.slane %v1161, %v1168
        %v1171 = vunpack.c.l.s4 1934713408
        %v1172 = vunpack.c.0.s8 %v1171
        %v1173 = vlaneseq
        %v1174 = vshrl.u32 %v1173, 7
        %v1175 = vsub.s32 %v1172, %v1174
        %v1176 = vrot.slane %v1162, %v1175
        %v1177 = vcombine.low %v1112, %v1128
        %v1178 = vcombine.high %v1112, %v1128
        %v1180 = vunpack.c.l.s4 1934713408
        %v1181 = vunpack.c.0.s8 %v1180
        %v1182 = vlaneseq
        %v1183 = vshrl.u32 %v1182, 7
        %v1184 = vsub.s32 %v1181, %v1183
        %v1185 = vrot.slane %v1177, %v1184
        %v1187 = vunpack.c.l.s4 1934713408
        %v1188 = vunpack.c.0.s8 %v1187
        %v1189 = vlaneseq
        %v1190 = vshrl.u32 %v1189, 7
        %v1191 = vsub.s32 %v1188, %v1190
        %v1192 = vrot.slane %v1178, %v1191
        %v1193 = vcombine.low %v1137, %v1169
        %v1194 = vcombine.high %v1137, %v1169
        %v1195 = vcombine.low %v1144, %v1176
        %v1196 = vcombine.high %v1144, %v1176
        %v1197 = vcombine.low %v1153, %v1185
        %v1198 = vcombine.high %v1153, %v1185
        %v1199 = vcombine.low %v1160, %v1192
        %v1200 = vcombine.high %v1160, %v1192
        %v1201 = vcombine.low %v1057, %v1058
        %v1202 = vcombine.high %v1057, %v1058
        %v1204 = vunpack.c.l.s4 1983009808
        %v1205 = vunpack.c.0.s8 %v1204
        %v1206 = vlaneseq
        %v1207 = vshrl.u32 %v1206, 7
        %v1208 = vsub.s32 %v1205, %v1207
        %v1209 = vrot.slane %v1201, %v1208
        %v1211 = vunpack.c.l.s4 1983009808
        %v1212 = vunpack.c.0.s8 %v1211
        %v1213 = vlaneseq
        %v1214 = vshrl.u32 %v1213, 7
        %v1215 = vsub.s32 %v1212, %v1214
        %v1216 = vrot.slane %v1202, %v1215
        %v1217 = vcombine.low %v1193, %v1194
        %v1218 = vcombine.high %v1193, %v1194
        %v1220 = vunpack.c.l.s4 1983009808
        %v1221 = vunpack.c.0.s8 %v1220
        %v1222 = vlaneseq
        %v1223 = vshrl.u32 %v1222, 7
        %v1224 = vsub.s32 %v1221, %v1223
        %v1225 = vrot.slane %v1217, %v1224
        %v1227 = vunpack.c.l.s4 1983009808
        %v1228 = vunpack.c.0.s8 %v1227
        %v1229 = vlaneseq
        %v1230 = vshrl.u32 %v1229, 7
        %v1231 = vsub.s32 %v1228, %v1230
        %v1232 = vrot.slane %v1218, %v1231
        %v1233 = vcombine.low %v1059, %v1060
        %v1234 = vcombine.high %v1059, %v1060
        %v1236 = vunpack.c.l.s4 1983009808
        %v1237 = vunpack.c.0.s8 %v1236
        %v1238 = vlaneseq
        %v1239 = vshrl.u32 %v1238, 7
        %v1240 = vsub.s32 %v1237, %v1239
        %v1241 = vrot.slane %v1233, %v1240
        %v1243 = vunpack.c.l.s4 1983009808
        %v1244 = vunpack.c.0.s8 %v1243
        %v1245 = vlaneseq
        %v1246 = vshrl.u32 %v1245, 7
        %v1247 = vsub.s32 %v1244, %v1246
        %v1248 = vrot.slane %v1234, %v1247
        %v1249 = vcombine.low %v1195, %v1196
        %v1250 = vcombine.high %v1195, %v1196
        %v1252 = vunpack.c.l.s4 1983009808
        %v1253 = vunpack.c.0.s8 %v1252
        %v1254 = vlaneseq
        %v1255 = vshrl.u32 %v1254, 7
        %v1256 = vsub.s32 %v1253, %v1255
        %v1257 = vrot.slane %v1249, %v1256
        %v1259 = vunpack.c.l.s4 1983009808
        %v1260 = vunpack.c.0.s8 %v1259
        %v1261 = vlaneseq
        %v1262 = vshrl.u32 %v1261, 7
        %v1263 = vsub.s32 %v1260, %v1262
        %v1264 = vrot.slane %v1250, %v1263
        %v1265 = vcombine.low %v1209, %v1225
        %v1266 = vcombine.high %v1209, %v1225
        %v1268 = vunpack.c.l.s4 1934713408
        %v1269 = vunpack.c.0.s8 %v1268
        %v1270 = vlaneseq
        %v1271 = vshrl.u32 %v1270, 7
        %v1272 = vsub.s32 %v1269, %v1271
        %v1273 = vrot.slane %v1265, %v1272
        %v1275 = vunpack.c.l.s4 1934713408
        %v1276 = vunpack.c.0.s8 %v1275
        %v1277 = vlaneseq
        %v1278 = vshrl.u32 %v1277, 7
        %v1279 = vsub.s32 %v1276, %v1278
        %v1280 = vrot.slane %v1266, %v1279
        %v1281 = vcombine.low %v1216, %v1232
        %v1282 = vcombine.high %v1216, %v1232
        %v1284 = vunpack.c.l.s4 1934713408
        %v1285 = vunpack.c.0.s8 %v1284
        %v1286 = vlaneseq
        %v1287 = vshrl.u32 %v1286, 7
        %v1288 = vsub.s32 %v1285, %v1287
        %v1289 = vrot.slane %v1281, %v1288
        %v1291 = vunpack.c.l.s4 1934713408
        %v1292 = vunpack.c.0.s8 %v1291
        %v1293 = vlaneseq
        %v1294 = vshrl.u32 %v1293, 7
        %v1295 = vsub.s32 %v1292, %v1294
        %v1296 = vrot.slane %v1282, %v1295
        %v1297 = vcombine.low %v1241, %v1257
        %v1298 = vcombine.high %v1241, %v1257
        %v1300 = vunpack.c.l.s4 1934713408
        %v1301 = vunpack.c.0.s8 %v1300
        %v1302 = vlaneseq
        %v1303 = vshrl.u32 %v1302, 7
        %v1304 = vsub.s32 %v1301, %v1303
        %v1305 = vrot.slane %v1297, %v1304
        %v1307 = vunpack.c.l.s4 1934713408
        %v1308 = vunpack.c.0.s8 %v1307
        %v1309 = vlaneseq
        %v1310 = vshrl.u32 %v1309, 7
        %v1311 = vsub.s32 %v1308, %v1310
        %v1312 = vrot.slane %v1298, %v1311
        %v1313 = vcombine.low %v1248, %v1264
        %v1314 = vcombine.high %v1248, %v1264
        %v1316 = vunpack.c.l.s4 1934713408
        %v1317 = vunpack.c.0.s8 %v1316
        %v1318 = vlaneseq
        %v1319 = vshrl.u32 %v1318, 7
        %v1320 = vsub.s32 %v1317, %v1319
        %v1321 = vrot.slane %v1313, %v1320
        %v1323 = vunpack.c.l.s4 1934713408
        %v1324 = vunpack.c.0.s8 %v1323
        %v1325 = vlaneseq
        %v1326 = vshrl.u32 %v1325, 7
        %v1327 = vsub.s32 %v1324, %v1326
        %v1328 = vrot.slane %v1314, %v1327
        %v1329 = vcombine.low %v1273, %v1305
        %v1330 = vcombine.high %v1273, %v1305
        %v1331 = vcombine.low %v1280, %v1312
        %v1332 = vcombine.high %v1280, %v1312
        %v1333 = vcombine.low %v1289, %v1321
        %v1334 = vcombine.high %v1289, %v1321
        %v1335 = vcombine.low %v1296, %v1328
        %v1336 = vcombine.high %v1296, %v1328
        %v1337 = vcombine.low %v1061, %v1062
        %v1338 = vcombine.high %v1061, %v1062
        %v1340 = vunpack.c.l.s4 1983009808
        %v1341 = vunpack.c.0.s8 %v1340
        %v1342 = vlaneseq
        %v1343 = vshrl.u32 %v1342, 7
        %v1344 = vsub.s32 %v1341, %v1343
        %v1345 = vrot.slane %v1337, %v1344
        %v1347 = vunpack.c.l.s4 1983009808
        %v1348 = vunpack.c.0.s8 %v1347
        %v1349 = vlaneseq
        %v1350 = vshrl.u32 %v1349, 7
        %v1351 = vsub.s32 %v1348, %v1350
        %v1352 = vrot.slane %v1338, %v1351
        %v1353 = vcombine.low %v1197, %v1198
        %v1354 = vcombine.high %v1197, %v1198
        %v1356 = vunpack.c.l.s4 1983009808
        %v1357 = vunpack.c.0.s8 %v1356
        %v1358 = vlaneseq
        %v1359 = vshrl.u32 %v1358, 7
        %v1360 = vsub.s32 %v1357, %v1359
        %v1361 = vrot.slane %v1353, %v1360
        %v1363 = vunpack.c.l.s4 1983009808
        %v1364 = vunpack.c.0.s8 %v1363
        %v1365 = vlaneseq
        %v1366 = vshrl.u32 %v1365, 7
        %v1367 = vsub.s32 %v1364, %v1366
        %v1368 = vrot.slane %v1354, %v1367
        %v1369 = vcombine.low %v1063, %v1064
        %v1370 = vcombine.high %v1063, %v1064
        %v1372 = vunpack.c.l.s4 1983009808
        %v1373 = vunpack.c.0.s8 %v1372
        %v1374 = vlaneseq
        %v1375 = vshrl.u32 %v1374, 7
        %v1376 = vsub.s32 %v1373, %v1375
        %v1377 = vrot.slane %v1369, %v1376
        %v1379 = vunpack.c.l.s4 1983009808
        %v1380 = vunpack.c.0.s8 %v1379
        %v1381 = vlaneseq
        %v1382 = vshrl.u32 %v1381, 7
        %v1383 = vsub.s32 %v1380, %v1382
        %v1384 = vrot.slane %v1370, %v1383
        %v1385 = vcombine.low %v1199, %v1200
        %v1386 = vcombine.high %v1199, %v1200
        %v1388 = vunpack.c.l.s4 1983009808
        %v1389 = vunpack.c.0.s8 %v1388
        %v1390 = vlaneseq
        %v1391 = vshrl.u32 %v1390, 7
        %v1392 = vsub.s32 %v1389, %v1391
        %v1393 = vrot.slane %v1385, %v1392
        %v1395 = vunpack.c.l.s4 1983009808
        %v1396 = vunpack.c.0.s8 %v1395
        %v1397 = vlaneseq
        %v1398 = vshrl.u32 %v1397, 7
        %v1399 = vsub.s32 %v1396, %v1398
        %v1400 = vrot.slane %v1386, %v1399
        %v1401 = vcombine.low %v1345, %v1361
        %v1402 = vcombine.high %v1345, %v1361
        %v1404 = vunpack.c.l.s4 1934713408
        %v1405 = vunpack.c.0.s8 %v1404
        %v1406 = vlaneseq
        %v1407 = vshrl.u32 %v1406, 7
        %v1408 = vsub.s32 %v1405, %v1407
        %v1409 = vrot.slane %v1401, %v1408
        %v1411 = vunpack.c.l.s4 1934713408
        %v1412 = vunpack.c.0.s8 %v1411
        %v1413 = vlaneseq
        %v1414 = vshrl.u32 %v1413, 7
        %v1415 = vsub.s32 %v1412, %v1414
        %v1416 = vrot.slane %v1402, %v1415
        %v1417 = vcombine.low %v1352, %v1368
        %v1418 = vcombine.high %v1352, %v1368
        %v1420 = vunpack.c.l.s4 1934713408
        %v1421 = vunpack.c.0.s8 %v1420
        %v1422 = vlaneseq
        %v1423 = vshrl.u32 %v1422, 7
        %v1424 = vsub.s32 %v1421, %v1423
        %v1425 = vrot.slane %v1417, %v1424
        %v1427 = vunpack.c.l.s4 1934713408
        %v1428 = vunpack.c.0.s8 %v1427
        %v1429 = vlaneseq
        %v1430 = vshrl.u32 %v1429, 7
        %v1431 = vsub.s32 %v1428, %v1430
        %v1432 = vrot.slane %v1418, %v1431
        %v1433 = vcombine.low %v1377, %v1393
        %v1434 = vcombine.high %v1377, %v1393
        %v1436 = vunpack.c.l.s4 1934713408
        %v1437 = vunpack.c.0.s8 %v1436
        %v1438 = vlaneseq
        %v1439 = vshrl.u32 %v1438, 7
        %v1440 = vsub.s32 %v1437, %v1439
        %v1441 = vrot.slane %v1433, %v1440
        %v1443 = vunpack.c.l.s4 1934713408
        %v1444 = vunpack.c.0.s8 %v1443
        %v1445 = vlaneseq
        %v1446 = vshrl.u32 %v1445, 7
        %v1447 = vsub.s32 %v1444, %v1446
        %v1448 = vrot.slane %v1434, %v1447
        %v1449 = vcombine.low %v1384, %v1400
        %v1450 = vcombine.high %v1384, %v1400
        %v1452 = vunpack.c.l.s4 1934713408
        %v1453 = vunpack.c.0.s8 %v1452
        %v1454 = vlaneseq
        %v1455 = vshrl.u32 %v1454, 7
        %v1456 = vsub.s32 %v1453, %v1455
        %v1457 = vrot.slane %v1449, %v1456
        %v1459 = vunpack.c.l.s4 1934713408
        %v1460 = vunpack.c.0.s8 %v1459
        %v1461 = vlaneseq
        %v1462 = vshrl.u32 %v1461, 7
        %v1463 = vsub.s32 %v1460, %v1462
        %v1464 = vrot.slane %v1450, %v1463
        %v1465 = vcombine.low %v1409, %v1441
        %v1466 = vcombine.high %v1409, %v1441
        %v1467 = vcombine.low %v1416, %v1448
        %v1468 = vcombine.high %v1416, %v1448
        %v1469 = vcombine.low %v1425, %v1457
        %v1470 = vcombine.high %v1425, %v1457
        %v1471 = vcombine.low %v1432, %v1464
        %v1472 = vcombine.high %v1432, %v1464
        %1475 = vrot.lane.b32.xlu0 %v1330, 2
        %v1476 = vpop.permute.xlu0 %1475
        %1477 = vrot.lane.b32.xlu0 %v1466, 2
        %v1478 = vpop.permute.xlu0 %1477
        %1483 = vrot.lane.b32.xlu0 %v1331, 4
        %v1484 = vpop.permute.xlu0 %1483
        %1485 = vrot.lane.b32.xlu0 %v1467, 4
        %v1486 = vpop.permute.xlu0 %1485
        %1491 = vrot.lane.b32.xlu0 %v1332, 6
        %v1492 = vpop.permute.xlu0 %1491
        %1493 = vrot.lane.b32.xlu0 %v1468, 6
        %v1494 = vpop.permute.xlu0 %1493
        %1499 = vrot.lane.b32.xlu0 %v1333, 8
        %v1500 = vpop.permute.xlu0 %1499
        %1501 = vrot.lane.b32.xlu0 %v1469, 8
        %v1502 = vpop.permute.xlu0 %1501
        %1507 = vrot.lane.b32.xlu0 %v1334, 10
        %v1508 = vpop.permute.xlu0 %1507
        %1509 = vrot.lane.b32.xlu0 %v1470, 10
        %v1510 = vpop.permute.xlu0 %1509
        %1515 = vrot.lane.b32.xlu0 %v1335, 12
        %v1516 = vpop.permute.xlu0 %1515
        %1517 = vrot.lane.b32.xlu0 %v1471, 12
        %v1518 = vpop.permute.xlu0 %1517
        %1523 = vrot.lane.b32.xlu0 %v1336, 14
        %v1524 = vpop.permute.xlu0 %1523
        %1525 = vrot.lane.b32.xlu0 %v1472, 14
        %v1526 = vpop.permute.xlu0 %1525
        %vm1529 = vcmask 15360
        %v1530 = vsel %vm1529, %v1329, %v1476
        %v1531 = vsel %vm1529, %v1465, %v1478
        %vm1532 = vcmask 31744
        %v1533 = vsel %vm1532, %v1530, %v1484
        %v1534 = vsel %vm1532, %v1531, %v1486
        %vm1535 = vcmask 48128
        %v1536 = vsel %vm1535, %v1533, %v1492
        %v1537 = vsel %vm1535, %v1534, %v1494
        %vm1538 = vcmask 64512
        %v1539 = vsel %vm1538, %v1536, %v1500
        %v1540 = vsel %vm1538, %v1537, %v1502
        %vm1541 = vcmask 80896
        %v1542 = vsel %vm1541, %v1539, %v1508
        %v1543 = vsel %vm1541, %v1540, %v1510
        %vm1544 = vcmask 97280
        %v1545 = vsel %vm1544, %v1542, %v1516
        %v1546 = vsel %vm1544, %v1543, %v1518
        %vm1547 = vcmask 113664
        %v1548 = vsel %vm1547, %v1545, %v1524
        %v1549 = vsel %vm1547, %v1546, %v1526
        %vm1550 = vcmask 130048
        %1551 = vst.msk [vmem:[%s151] sm:$0xff] %vm1550, %v1548
        %1552 = vst.msk [vmem:[%s151 + $0x8] sm:$0xff] %vm1550, %v1549
        %s1553 = sand.u32 %s68, 1
        %s1554 = scalar_lea.sflag [#allocation4], %s1553
        %s1555 = sand.u32 %s68, 1
        %s1556 = smul.addr %s1555, 16
        %s1557 = scalar_lea.vmem [#allocation5], %s1556
        // Predicated region
        $region29: #{tpu_custom_call.1} parent=23 // pred_check
          %p1558 = pneg %p78
        $region30: #{tpu_custom_call.1} parent=23 // pred_check_branch
          %1560 = sbr.rel (%p1558) target = $region32
        $region31: #{tpu_custom_call.1} parent=23 // pred_region
          %s1561 = smul.u32 2, %s23
          %s1563 = ssub.s32 256, 256
          %1564 = vsyncadd %s1554, %s1563
          %s1565 = smul.addr %s22, 2
          %s1566 = sadd.s32 %s1561, %s1565
          %s1567 = smul.addr %s1566, 128
          %s1568 = scalar_lea.hbm %s1, %s1567
          %s1569 = sshll.u32 %s1557, 4
          %s1570 = int_to_ptr.vmem [resolvable:$true] %s1569
          %1575 = dma.vmem_to_hbm [thread:$0]  %s1570, 256, %s1568, %s1554, 128, 128, 8
        $region32: #{tpu_custom_call.1} parent=23 // pred_fallthru
          _
      $region24: #{tpu_custom_call.1} parent=5 // pred_fallthru
        _
      %p1576 = scmp.le.s32.totalorder 2, %s13
      // Predicated region
      $region33: #{tpu_custom_call.1} parent=5 // pred_check
        %p1577 = pneg %p1576
      $region34: #{tpu_custom_call.1} parent=5 // pred_check_branch
        %1579 = sbr.rel (%p1577) target = $region36
      $region35: #{tpu_custom_call.1} parent=5 // pred_region
        %s1580 = ssub.s32 %s13, 2
        // Predicated region
        $region37: #{tpu_custom_call.1} parent=35 // pred_check
          %p1581 = pneg %p84
        $region38: #{tpu_custom_call.1} parent=35 // pred_check_branch
          %1583 = sbr.rel (%p1581) target = $region40
        $region39: #{tpu_custom_call.1} parent=35 // pred_region
          %s1584 = sand.u32 %s69, 1
          %s1585 = scalar_lea.sflag [#allocation4], %s1584
          %s1586 = sand.u32 %s69, 1
          %s1587 = smul.addr %s1586, 16
          %s1588 = scalar_lea.vmem [#allocation5], %s1587
          %1589 = dma.done %s1585, 256
        $region40: #{tpu_custom_call.1} parent=35 // pred_fallthru
          _
      $region36: #{tpu_custom_call.1} parent=5 // pred_fallthru
        _
    $region6: #{tpu_custom_call.1} parent=1 // loop_footer
      %s17 = sadd.s32 1, %s13
    $region7: #{tpu_custom_call.1} parent=1 // loop_footer_branch
      %12 = sbr.rel target = $region3
    $region8: #{tpu_custom_call.1} parent=1 // loop_exit
      _
    %1590 = vsyncpa [#allocation3], 1
    %s1591 = scalar_lea.sflag [#allocation3], 1
    %1592 = vsyncpa %s1591, 1
    %1593 = vsyncpa [#allocation4], 1
    %s1594 = scalar_lea.sflag [#allocation4], 1
    %1595 = vsyncpa %s1594, 1

</llo_original>
